<compile_context>
chip_gen: v5e
topology: v5e:2x2
jax: 0.10.0
libtpu: 0.0.40
codegen_flags: <defaults>
</compile_context>

<pallas_src>
import jax
import jax.numpy as jnp
from jax import lax
from jax.experimental import pallas as pl
from jax.experimental.pallas import tpu as pltpu

K_CHUNK = 128  # table-row chunk (lane-width of the selector slab)


def bpr_kernel(idx_ref, ut_ref, it_ref, o_ref):
    # idx_ref: (3, TB) int32            -- rows: user, item_i, item_j (lanes=batch)
    # ut_ref:  (NCU, D, K_CHUNK) f32    -- user table, transposed + row-chunked
    # it_ref:  (NCI, D, K_CHUNK) f32    -- item table, transposed + row-chunked
    # o_ref:   (1, TB) f32              -- lane-dense output block
    ncu, d, kc = ut_ref.shape
    nci = it_ref.shape[0]
    tb = o_ref.shape[1]

    u_idx = idx_ref[0:1, :]  # (1, TB)
    i_idx = idx_ref[1:2, :]
    j_idx = idx_ref[2:3, :]

    # Chunk-shaped row iota, built once and offset per chunk.
    base_rows = lax.broadcasted_iota(jnp.int32, (kc, tb), 0)  # (K_CHUNK, TB)

    def gather(table_ref, n_chunks, sel_fn):
        # sum_c  table_chunk(D, KC) @ selector(KC, TB)  ->  (D, TB)
        def chunk_dot(c, tbl_chunk):
            sel = sel_fn(base_rows + c * kc)                    # (KC, TB)
            return jnp.dot(tbl_chunk, sel,
                           preferred_element_type=jnp.float32,
                           precision=lax.Precision.HIGHEST)

        if n_chunks == 1:                                       # static fast path
            return chunk_dot(0, table_ref[0])

        def body(c, acc):
            return acc + chunk_dot(c, table_ref[c])

        return lax.fori_loop(0, n_chunks, body,
                             jnp.zeros((d, tb), jnp.float32),
                             unroll=(n_chunks <= 8))

    # Fused one-hot gather of user rows: U^T[:, user]        -> (D, TB)
    u_t = gather(ut_ref, ncu,
                 lambda rows: (rows == u_idx).astype(jnp.float32))
    # Merged signed selector: (I[item_i] - I[item_j])^T      -> (D, TB)
    diff_t = gather(it_ref, nci,
                    lambda rows: (rows == i_idx).astype(jnp.float32)
                                 - (rows == j_idx).astype(jnp.float32))

    # x_uij = sum_d u * (i - j): one multiply + one sublane reduction,
    # landing directly as a lane-dense (1, TB) block.
    o_ref[...] = jnp.sum(u_t * diff_t, axis=0, keepdims=True)


def _round_up(x, m):
    return ((x + m - 1) // m) * m


def bpr_forward(U, I, user, item_i, item_j, *, tb_max=512):
    B = user.shape[0]
    NU, D = U.shape
    NI, _ = I.shape

    # Lane-dense batch tile (multiple of 128).  Cap it so grid >= 2 whenever
    # the padded batch allows -> v7x can shard the batch across both TCs.
    b128 = _round_up(B, 128)
    if b128 >= 256:
        tb = min(tb_max, max(128, (b128 // 2 // 128) * 128))
    else:
        tb = 128
    b_pad = _round_up(B, tb)
    grid = b_pad // tb

    # Stack + pad indices: one (3, b_pad) int32 array -> single per-step DMA.
    idx = jnp.stack([user, item_i, item_j]).astype(jnp.int32)   # (3, B)
    idx = jnp.pad(idx, ((0, 0), (0, b_pad - B)))                # pad with row 0

    # Wrapper-side layout plumbing only: transpose + zero-pad rows to a
    # multiple of K_CHUNK, then chunk along the row axis so the kernel indexes
    # chunks on the leading dim.
    def prep_table(T, n_pad):
        n, d = T.shape
        Tt = jnp.zeros((d, n_pad), jnp.float32).at[:, :n].set(
            T.astype(jnp.float32).T)
        return Tt.reshape(d, n_pad // K_CHUNK, K_CHUNK).transpose(1, 0, 2)

    nu_pad = _round_up(NU, K_CHUNK)
    ni_pad = _round_up(NI, K_CHUNK)
    ncu = nu_pad // K_CHUNK
    nci = ni_pad // K_CHUNK
    U_t = prep_table(U, nu_pad)   # (NCU, D, K_CHUNK)
    I_t = prep_table(I, ni_pad)   # (NCI, D, K_CHUNK)

    # Explicit VMEM budget: tables (single-buffered) + pipelined index/output
    # tiles + in-kernel working set, with ~25% headroom.
    table_bytes = (ncu + nci) * D * K_CHUNK * 4
    idx_bytes = 2 * 8 * tb * 4            # (3,tb) padded to 8 sublanes, 2 bufs
    out_bytes = 2 * 8 * tb * 4
    work_bytes = 2 * D * tb * 4 + 3 * K_CHUNK * tb * 4
    vmem_limit = min(
        int((table_bytes + idx_bytes + out_bytes + work_bytes) * 1.25) + (2 << 20),
        64 << 20)

    out = pl.pallas_call(
        bpr_kernel,
        out_shape=jax.ShapeDtypeStruct((1, b_pad), jnp.float32),
        grid=(grid,),
        in_specs=[
            pl.BlockSpec((3, tb), lambda g: (0, g)),
            # Tables: constant index_map, never re-fetched -> single buffer.
            pl.BlockSpec((ncu, D, K_CHUNK), lambda g: (0, 0, 0),
                         pipeline_mode=pl.Buffered(1)),
            pl.BlockSpec((nci, D, K_CHUNK), lambda g: (0, 0, 0),
                         pipeline_mode=pl.Buffered(1)),
        ],
        out_specs=pl.BlockSpec((1, tb), lambda g: (0, g)),
        compiler_params=pltpu.CompilerParams(
            dimension_semantics=("parallel",),
            vmem_limit_bytes=vmem_limit),
    )(idx, U_t, I_t)

    return out[0, :B]  # (B,) float32, matches torch output shape/dtype


if __name__ == "__main__":
    num_users, num_items, latent_dim = 32, 64, 32
    batch = 16

    key = jax.random.PRNGKey(0)
    k_u, k_i, k_user, k_ii, k_ij = jax.random.split(key, 5)

    # nn.Embedding default init ~ N(0, 1); deterministic synthetic weights.
    U = jax.random.normal(k_u, (num_users, latent_dim), dtype=jnp.float32)
    I = jax.random.normal(k_i, (num_items, latent_dim), dtype=jnp.float32)

    user = jax.random.randint(k_user, (batch,), 0, num_users, dtype=jnp.int32)
    item_i = jax.random.randint(k_ii, (batch,), 0, num_items, dtype=jnp.int32)
    item_j = jax.random.randint(k_ij, (batch,), 0, num_items, dtype=jnp.int32)

    x_uij = jax.jit(bpr_forward)(U, I, user, item_i, item_j)
    jax.block_until_ready(x_uij)

    # Pure-JAX reference check (same semantics as the torch forward).
    u_e, i_e, j_e = U[user], I[item_i], I[item_j]
    ref = jnp.sum(u_e * i_e, axis=1) - jnp.sum(u_e * j_e, axis=1)
    assert x_uij.shape == (batch,) and x_uij.dtype == jnp.float32
    assert jnp.allclose(x_uij, ref, atol=1e-4, rtol=1e-5)

    print("KERNEL_OK")
</pallas_src>

<mosaic_0001>
module attributes {stable_mosaic.version = 11 : i64} {
  func.func @bpr_kernel(%arg0: i32, %arg1: memref<3x128xi32, #tpu.memory_space<vmem>>, %arg2: memref<1x32x128xf32, #tpu.memory_space<vmem>>, %arg3: memref<1x32x128xf32, #tpu.memory_space<vmem>>, %arg4: memref<1x128xf32, #tpu.memory_space<vmem>>) attributes {dimension_semantics = [#tpu.dimension_semantics<parallel>], iteration_bounds = array<i64: 1>, scalar_prefetch = 0 : i64, scratch_operands = 0 : i64, tpu.core_type = #tpu.core_type<tc>, window_params = [{transform_indices = @transform_0, window_bounds = array<i64: 3, 128>}, {pipeline_mode = #tpu.pipeline_mode<synchronous>, transform_indices = @transform_1, window_bounds = array<i64: 1, 32, 128>}, {pipeline_mode = #tpu.pipeline_mode<synchronous>, transform_indices = @transform_2, window_bounds = array<i64: 1, 32, 128>}, {transform_indices = @transform_3, window_bounds = array<i64: 1, 128>}]} {
    %c0 = arith.constant 0 : index
    %c0_0 = arith.constant 0 : index
    %0 = vector.load %arg1[%c0, %c0_0] : memref<3x128xi32, #tpu.memory_space<vmem>>, vector<1x128xi32>
    %c1 = arith.constant 1 : index
    %c0_1 = arith.constant 0 : index
    %1 = vector.load %arg1[%c1, %c0_1] : memref<3x128xi32, #tpu.memory_space<vmem>>, vector<1x128xi32>
    %c2 = arith.constant 2 : index
    %c0_2 = arith.constant 0 : index
    %2 = vector.load %arg1[%c2, %c0_2] : memref<3x128xi32, #tpu.memory_space<vmem>>, vector<1x128xi32>
    %3 = tpu.iota {dimensions = array<i32: 0>} : vector<128x128xi32>
    %c0_3 = arith.constant 0 : index
    %c0_4 = arith.constant 0 : index
    %c0_5 = arith.constant 0 : index
    %4 = vector.load %arg2[%c0_3, %c0_4, %c0_5] : memref<1x32x128xf32, #tpu.memory_space<vmem>>, vector<1x32x128xf32>
    %5 = vector.shape_cast %4 : vector<1x32x128xf32> to vector<32x128xf32>
    %c0_i32 = arith.constant 0 : i32
    %6 = vector.broadcast %c0_i32 : i32 to vector<128x128xi32>
    %7 = arith.addi %3, %6 : vector<128x128xi32>
    %8 = vector.broadcast %0 : vector<1x128xi32> to vector<128x128xi32>
    %9 = arith.cmpi eq, %7, %8 : vector<128x128xi32>
    %10 = arith.extui %9 : vector<128x128xi1> to vector<128x128xi32>
    %11 = arith.sitofp %10 : vector<128x128xi32> to vector<128x128xf32>
    %cst = arith.constant dense<0.000000e+00> : vector<32x128xf32>
    %12 = tpu.matmul %5, %11, %cst {dimension_numbers = #tpu.dot_dimension_numbers<[1], [0], [0], [1], [0, 0, 1, 1], [], []>, precision = #tpu.contract_precision<fp32>} : vector<32x128xf32>, vector<128x128xf32>, vector<32x128xf32> -> vector<32x128xf32>
    %c0_6 = arith.constant 0 : index
    %c0_7 = arith.constant 0 : index
    %c0_8 = arith.constant 0 : index
    %13 = vector.load %arg3[%c0_6, %c0_7, %c0_8] : memref<1x32x128xf32, #tpu.memory_space<vmem>>, vector<1x32x128xf32>
    %14 = vector.shape_cast %13 : vector<1x32x128xf32> to vector<32x128xf32>
    %c0_i32_9 = arith.constant 0 : i32
    %15 = vector.broadcast %c0_i32_9 : i32 to vector<128x128xi32>
    %16 = arith.addi %3, %15 : vector<128x128xi32>
    %17 = vector.broadcast %1 : vector<1x128xi32> to vector<128x128xi32>
    %18 = arith.cmpi eq, %16, %17 : vector<128x128xi32>
    %19 = arith.extui %18 : vector<128x128xi1> to vector<128x128xi32>
    %20 = arith.sitofp %19 : vector<128x128xi32> to vector<128x128xf32>
    %21 = vector.broadcast %2 : vector<1x128xi32> to vector<128x128xi32>
    %22 = arith.cmpi eq, %16, %21 : vector<128x128xi32>
    %23 = arith.extui %22 : vector<128x128xi1> to vector<128x128xi32>
    %24 = arith.sitofp %23 : vector<128x128xi32> to vector<128x128xf32>
    %25 = arith.subf %20, %24 : vector<128x128xf32>
    %cst_10 = arith.constant dense<0.000000e+00> : vector<32x128xf32>
    %26 = tpu.matmul %14, %25, %cst_10 {dimension_numbers = #tpu.dot_dimension_numbers<[1], [0], [0], [1], [0, 0, 1, 1], [], []>, precision = #tpu.contract_precision<fp32>} : vector<32x128xf32>, vector<128x128xf32>, vector<32x128xf32> -> vector<32x128xf32>
    %27 = arith.mulf %12, %26 : vector<32x128xf32>
    %cst_11 = arith.constant dense<0.000000e+00> : vector<128xf32>
    %28 = vector.multi_reduction <add>, %27, %cst_11 [0] : vector<32x128xf32> to vector<128xf32>
    %29 = vector.shape_cast %28 : vector<128xf32> to vector<1x128xf32>
    %c0_12 = arith.constant 0 : index
    %c0_13 = arith.constant 0 : index
    %30 = vector.load %arg4[%c0_12, %c0_13] : memref<1x128xf32, #tpu.memory_space<vmem>>, vector<1x128xf32>
    tpu.vector_store %arg4[%c0_12, %c0_13], %29 {strides = array<i32>} : memref<1x128xf32, #tpu.memory_space<vmem>>, vector<1x128xf32>,
    return
  }
  func.func @transform_0(%arg0: i32) -> (i32, i32) {
    %c0_i32 = arith.constant 0 : i32
    %c0_i32_0 = arith.constant 0 : i32
    return %c0_i32, %arg0 : i32, i32
  }
  func.func @transform_1(%arg0: i32) -> (i32, i32, i32) {
    %c0_i32 = arith.constant 0 : i32
    %c0_i32_0 = arith.constant 0 : i32
    %c0_i32_1 = arith.constant 0 : i32
    %c0_i32_2 = arith.constant 0 : i32
    return %c0_i32, %c0_i32_0, %c0_i32_1 : i32, i32, i32
  }
  func.func @transform_2(%arg0: i32) -> (i32, i32, i32) {
    %c0_i32 = arith.constant 0 : i32
    %c0_i32_0 = arith.constant 0 : i32
    %c0_i32_1 = arith.constant 0 : i32
    %c0_i32_2 = arith.constant 0 : i32
    return %c0_i32, %c0_i32_0, %c0_i32_1 : i32, i32, i32
  }
  func.func @transform_3(%arg0: i32) -> (i32, i32) {
    %c0_i32 = arith.constant 0 : i32
    %c0_i32_0 = arith.constant 0 : i32
    return %c0_i32, %arg0 : i32, i32
  }
}

</mosaic_0001>

<llo_original>
// kernel: bpr_forward.1
$region0: #{bpr_forward.1}
  #allocation0 [shape = 'u32[]', space=smem, size = 0x4, offset = 0x4, fixed_abs, tag = 'smem constant byte address 0x4 - core index']
  #allocation1 [shape = 'u32[72,128]{1,0:T(1,128)}', space=vmem, size = 0x9000, scoped, tag = 'internal scratch']
  %s0 = inlined_call_operand.vmem [shape: s32[3,128], index: 0, kind: input, shape index: {}]
  %s1 = inlined_call_operand.vmem [shape: f32[1,32,128], index: 1, kind: input, shape index: {}]
  %s2 = inlined_call_operand.vmem [shape: f32[1,32,128], index: 2, kind: input, shape index: {}]
  %s3 = inlined_call_operand.vmem [shape: f32[1,128], index: 3, kind: output, shape index: {}]
  %s4 = sld [smem:[#allocation0]]
  $region22: #{bpr_forward.1} parent=0
    _
  %s6 = ssub.s32 1, %s4
  %s7 = scalar_select 0, %s6, %s4
  // Predicated region
  $region2: #{bpr_forward.1} parent=0 // pred_check
    _
  $region3: #{bpr_forward.1} parent=0 // pred_check_branch
    %9 = sbr.rel (0) target = $region5
  $region4: #{bpr_forward.1} parent=0 // pred_region
    _
  $region5: #{bpr_forward.1} parent=0 // pred_fallthru
    _
  // Predicated region
  $region6: #{bpr_forward.1} parent=0 // pred_check
    _
  $region7: #{bpr_forward.1} parent=0 // pred_check_branch
    %11 = sbr.rel (0) target = $region9
  $region8: #{bpr_forward.1} parent=0 // pred_region
    _
  $region9: #{bpr_forward.1} parent=0 // pred_fallthru
    _
  // Predicated region
  $region10: #{bpr_forward.1} parent=0 // pred_check
    _
  $region11: #{bpr_forward.1} parent=0 // pred_check_branch
    %13 = sbr.rel (0) target = $region13
  $region12: #{bpr_forward.1} parent=0 // pred_region
    _
  $region13: #{bpr_forward.1} parent=0 // pred_fallthru
    _
  %v14 = vld [vmem:[%s0] sm:$0x1]
  %v15 = vld [vmem:[%s0 + $0x1] sm:$0x1]
  %v16 = vld [vmem:[%s0 + $0x2] sm:$0x1]
  %v17 = vlaneseq
  %v18 = vshrl.u32 %v17, 7
  %v19 = vadd.s32 %v18, 8
  %v20 = vadd.s32 %v18, 16
  %v21 = vadd.s32 %v18, 24
  %v22 = vadd.s32 %v18, 32
  %v23 = vadd.s32 %v18, 40
  %v24 = vadd.s32 %v18, 48
  %v25 = vadd.s32 %v18, 56
  %v26 = vadd.s32 %v18, 64
  %v27 = vadd.s32 %v18, 72
  %v28 = vadd.s32 %v18, 80
  %v29 = vadd.s32 %v18, 88
  %v30 = vadd.s32 %v18, 96
  %v31 = vadd.s32 %v18, 104
  %v32 = vadd.s32 %v18, 112
  %v33 = vadd.s32 %v18, 120
  %v34 = vld [vmem:[%s1] sm:$0xff]
  %v35 = vld [vmem:[%s1 + $0x8] sm:$0xff]
  %v36 = vld [vmem:[%s1 + $0x10] sm:$0xff]
  %v37 = vld [vmem:[%s1 + $0x18] sm:$0xff]
  %v38 = vperm.slane %v14, 0
  %vm39 = vcmp.eq.s32.totalorder %v18, %v38
  %vm40 = vcmp.eq.s32.totalorder %v19, %v38
  %vm41 = vcmp.eq.s32.totalorder %v20, %v38
  %vm42 = vcmp.eq.s32.totalorder %v21, %v38
  %vm43 = vcmp.eq.s32.totalorder %v22, %v38
  %vm44 = vcmp.eq.s32.totalorder %v23, %v38
  %vm45 = vcmp.eq.s32.totalorder %v24, %v38
  %vm46 = vcmp.eq.s32.totalorder %v25, %v38
  %vm47 = vcmp.eq.s32.totalorder %v26, %v38
  %vm48 = vcmp.eq.s32.totalorder %v27, %v38
  %vm49 = vcmp.eq.s32.totalorder %v28, %v38
  %vm50 = vcmp.eq.s32.totalorder %v29, %v38
  %vm51 = vcmp.eq.s32.totalorder %v30, %v38
  %vm52 = vcmp.eq.s32.totalorder %v31, %v38
  %vm53 = vcmp.eq.s32.totalorder %v32, %v38
  %vm54 = vcmp.eq.s32.totalorder %v33, %v38
  %v55 = vsel %vm39, 1, 0
  %v56 = vsel %vm40, 1, 0
  %v57 = vsel %vm41, 1, 0
  %v58 = vsel %vm42, 1, 0
  %v59 = vsel %vm43, 1, 0
  %v60 = vsel %vm44, 1, 0
  %v61 = vsel %vm45, 1, 0
  %v62 = vsel %vm46, 1, 0
  %v63 = vsel %vm47, 1, 0
  %v64 = vsel %vm48, 1, 0
  %v65 = vsel %vm49, 1, 0
  %v66 = vsel %vm50, 1, 0
  %v67 = vsel %vm51, 1, 0
  %v68 = vsel %vm52, 1, 0
  %v69 = vsel %vm53, 1, 0
  %v70 = vsel %vm54, 1, 0
  %v71 = vcvt.s32.f32 %v55
  %v72 = vcvt.s32.f32 %v56
  %v73 = vcvt.s32.f32 %v57
  %v74 = vcvt.s32.f32 %v58
  %v75 = vcvt.s32.f32 %v59
  %v76 = vcvt.s32.f32 %v60
  %v77 = vcvt.s32.f32 %v61
  %v78 = vcvt.s32.f32 %v62
  %v79 = vcvt.s32.f32 %v63
  %v80 = vcvt.s32.f32 %v64
  %v81 = vcvt.s32.f32 %v65
  %v82 = vcvt.s32.f32 %v66
  %v83 = vcvt.s32.f32 %v67
  %v84 = vcvt.s32.f32 %v68
  %v85 = vcvt.s32.f32 %v69
  %v86 = vcvt.s32.f32 %v70
  %v87 = vand.u32 %v86, 4294901760
  %88 = vmatpush.msra.mxu0 %v87
  %v89 = vand.u32 %v85, 4294901760
  %90 = vmatpush.msra.mxu0 %v89
  %v91 = vand.u32 %v84, 4294901760
  %92 = vmatpush.msra.mxu0 %v91
  %v93 = vand.u32 %v83, 4294901760
  %94 = vmatpush.msra.mxu0 %v93
  %v95 = vand.u32 %v82, 4294901760
  %96 = vmatpush.msra.mxu0 %v95
  %v97 = vand.u32 %v81, 4294901760
  %98 = vmatpush.msra.mxu0 %v97
  %v99 = vand.u32 %v80, 4294901760
  %100 = vmatpush.msra.mxu0 %v99
  %v101 = vand.u32 %v79, 4294901760
  %102 = vmatpush.msra.mxu0 %v101
  %v103 = vand.u32 %v78, 4294901760
  %104 = vmatpush.msra.mxu0 %v103
  %v105 = vand.u32 %v77, 4294901760
  %106 = vmatpush.msra.mxu0 %v105
  %v107 = vand.u32 %v76, 4294901760
  %108 = vmatpush.msra.mxu0 %v107
  %v109 = vand.u32 %v75, 4294901760
  %110 = vmatpush.msra.mxu0 %v109
  %v111 = vand.u32 %v74, 4294901760
  %112 = vmatpush.msra.mxu0 %v111
  %v113 = vand.u32 %v73, 4294901760
  %114 = vmatpush.msra.mxu0 %v113
  %v115 = vand.u32 %v72, 4294901760
  %116 = vmatpush.msra.mxu0 %v115
  %v117 = vand.u32 %v71, 4294901760
  %118 = vmatpush.msra.mxu0 %v117
  %v119 = vand.u32 %v34, 4294901760
  %v120 = vsub.f32 %v34, %v119
  %v121 = vand.u32 %v120, 4294901760
  %v122 = vsub.f32 %v120, %v121
  %v123 = vand.u32 %v122, 4294901760
  %124 = vmatmul.f32.gmra.mxu0 %v123
  %v125 = vpop.f32.mrf.mxu0
  %v126 = vadd.f32 0.0, %v125
  %v127 = vand.u32 %v35, 4294901760
  %v128 = vsub.f32 %v35, %v127
  %v129 = vand.u32 %v128, 4294901760
  %v130 = vsub.f32 %v128, %v129
  %v131 = vand.u32 %v130, 4294901760
  %132 = vmatmul.f32.gmra.mxu0 %v131
  %v133 = vpop.f32.mrf.mxu0
  %v134 = vadd.f32 0.0, %v133
  %v135 = vand.u32 %v36, 4294901760
  %v136 = vsub.f32 %v36, %v135
  %v137 = vand.u32 %v136, 4294901760
  %v138 = vsub.f32 %v136, %v137
  %v139 = vand.u32 %v138, 4294901760
  %140 = vmatmul.f32.gmra.mxu0 %v139
  %v141 = vpop.f32.mrf.mxu0
  %v142 = vadd.f32 0.0, %v141
  %v143 = vand.u32 %v37, 4294901760
  %v144 = vsub.f32 %v37, %v143
  %v145 = vand.u32 %v144, 4294901760
  %v146 = vsub.f32 %v144, %v145
  %v147 = vand.u32 %v146, 4294901760
  %148 = vmatmul.f32.gmra.mxu0 %v147
  %v149 = vpop.f32.mrf.mxu0
  %v150 = vadd.f32 0.0, %v149
  %151 = vdwg.mxu0
  %v152 = vand.u32 %v86, 4294901760
  %v153 = vsub.f32 %v86, %v152
  %v154 = vand.u32 %v153, 4294901760
  %v155 = vsub.f32 %v153, %v154
  %v156 = vand.u32 %v155, 4294901760
  %157 = vmatpush.msra.mxu0 %v156
  %v158 = vand.u32 %v85, 4294901760
  %v159 = vsub.f32 %v85, %v158
  %v160 = vand.u32 %v159, 4294901760
  %v161 = vsub.f32 %v159, %v160
  %v162 = vand.u32 %v161, 4294901760
  %163 = vmatpush.msra.mxu0 %v162
  %v164 = vand.u32 %v84, 4294901760
  %v165 = vsub.f32 %v84, %v164
  %v166 = vand.u32 %v165, 4294901760
  %v167 = vsub.f32 %v165, %v166
  %v168 = vand.u32 %v167, 4294901760
  %169 = vmatpush.msra.mxu0 %v168
  %v170 = vand.u32 %v83, 4294901760
  %v171 = vsub.f32 %v83, %v170
  %v172 = vand.u32 %v171, 4294901760
  %v173 = vsub.f32 %v171, %v172
  %v174 = vand.u32 %v173, 4294901760
  %175 = vmatpush.msra.mxu0 %v174
  %v176 = vand.u32 %v82, 4294901760
  %v177 = vsub.f32 %v82, %v176
  %v178 = vand.u32 %v177, 4294901760
  %v179 = vsub.f32 %v177, %v178
  %v180 = vand.u32 %v179, 4294901760
  %181 = vmatpush.msra.mxu0 %v180
  %v182 = vand.u32 %v81, 4294901760
  %v183 = vsub.f32 %v81, %v182
  %v184 = vand.u32 %v183, 4294901760
  %v185 = vsub.f32 %v183, %v184
  %v186 = vand.u32 %v185, 4294901760
  %187 = vmatpush.msra.mxu0 %v186
  %v188 = vand.u32 %v80, 4294901760
  %v189 = vsub.f32 %v80, %v188
  %v190 = vand.u32 %v189, 4294901760
  %v191 = vsub.f32 %v189, %v190
  %v192 = vand.u32 %v191, 4294901760
  %193 = vmatpush.msra.mxu0 %v192
  %v194 = vand.u32 %v79, 4294901760
  %v195 = vsub.f32 %v79, %v194
  %v196 = vand.u32 %v195, 4294901760
  %v197 = vsub.f32 %v195, %v196
  %v198 = vand.u32 %v197, 4294901760
  %199 = vmatpush.msra.mxu0 %v198
  %v200 = vand.u32 %v78, 4294901760
  %v201 = vsub.f32 %v78, %v200
  %v202 = vand.u32 %v201, 4294901760
  %v203 = vsub.f32 %v201, %v202
  %v204 = vand.u32 %v203, 4294901760
  %205 = vmatpush.msra.mxu0 %v204
  %v206 = vand.u32 %v77, 4294901760
  %v207 = vsub.f32 %v77, %v206
  %v208 = vand.u32 %v207, 4294901760
  %v209 = vsub.f32 %v207, %v208
  %v210 = vand.u32 %v209, 4294901760
  %211 = vmatpush.msra.mxu0 %v210
  %v212 = vand.u32 %v76, 4294901760
  %v213 = vsub.f32 %v76, %v212
  %v214 = vand.u32 %v213, 4294901760
  %v215 = vsub.f32 %v213, %v214
  %v216 = vand.u32 %v215, 4294901760
  %217 = vmatpush.msra.mxu0 %v216
  %v218 = vand.u32 %v75, 4294901760
  %v219 = vsub.f32 %v75, %v218
  %v220 = vand.u32 %v219, 4294901760
  %v221 = vsub.f32 %v219, %v220
  %v222 = vand.u32 %v221, 4294901760
  %223 = vmatpush.msra.mxu0 %v222
  %v224 = vand.u32 %v74, 4294901760
  %v225 = vsub.f32 %v74, %v224
  %v226 = vand.u32 %v225, 4294901760
  %v227 = vsub.f32 %v225, %v226
  %v228 = vand.u32 %v227, 4294901760
  %229 = vmatpush.msra.mxu0 %v228
  %v230 = vand.u32 %v73, 4294901760
  %v231 = vsub.f32 %v73, %v230
  %v232 = vand.u32 %v231, 4294901760
  %v233 = vsub.f32 %v231, %v232
  %v234 = vand.u32 %v233, 4294901760
  %235 = vmatpush.msra.mxu0 %v234
  %v236 = vand.u32 %v72, 4294901760
  %v237 = vsub.f32 %v72, %v236
  %v238 = vand.u32 %v237, 4294901760
  %v239 = vsub.f32 %v237, %v238
  %v240 = vand.u32 %v239, 4294901760
  %241 = vmatpush.msra.mxu0 %v240
  %v242 = vand.u32 %v71, 4294901760
  %v243 = vsub.f32 %v71, %v242
  %v244 = vand.u32 %v243, 4294901760
  %v245 = vsub.f32 %v243, %v244
  %v246 = vand.u32 %v245, 4294901760
  %247 = vmatpush.msra.mxu0 %v246
  %v248 = vand.u32 %v34, 4294901760
  %249 = vmatmul.f32.gmra.mxu0 %v248
  %v250 = vpop.f32.mrf.mxu0
  %v251 = vadd.f32 %v126, %v250
  %v252 = vand.u32 %v35, 4294901760
  %253 = vmatmul.f32.gmra.mxu0 %v252
  %v254 = vpop.f32.mrf.mxu0
  %v255 = vadd.f32 %v134, %v254
  %v256 = vand.u32 %v36, 4294901760
  %257 = vmatmul.f32.gmra.mxu0 %v256
  %v258 = vpop.f32.mrf.mxu0
  %v259 = vadd.f32 %v142, %v258
  %v260 = vand.u32 %v37, 4294901760
  %261 = vmatmul.f32.gmra.mxu0 %v260
  %v262 = vpop.f32.mrf.mxu0
  %v263 = vadd.f32 %v150, %v262
  %264 = vdwg.mxu0
  %v265 = vand.u32 %v86, 4294901760
  %v266 = vsub.f32 %v86, %v265
  %267 = vmatpush.msra.mxu0 %v266
  %v268 = vand.u32 %v85, 4294901760
  %v269 = vsub.f32 %v85, %v268
  %270 = vmatpush.msra.mxu0 %v269
  %v271 = vand.u32 %v84, 4294901760
  %v272 = vsub.f32 %v84, %v271
  %273 = vmatpush.msra.mxu0 %v272
  %v274 = vand.u32 %v83, 4294901760
  %v275 = vsub.f32 %v83, %v274
  %276 = vmatpush.msra.mxu0 %v275
  %v277 = vand.u32 %v82, 4294901760
  %v278 = vsub.f32 %v82, %v277
  %279 = vmatpush.msra.mxu0 %v278
  %v280 = vand.u32 %v81, 4294901760
  %v281 = vsub.f32 %v81, %v280
  %282 = vmatpush.msra.mxu0 %v281
  %v283 = vand.u32 %v80, 4294901760
  %v284 = vsub.f32 %v80, %v283
  %285 = vmatpush.msra.mxu0 %v284
  %v286 = vand.u32 %v79, 4294901760
  %v287 = vsub.f32 %v79, %v286
  %288 = vmatpush.msra.mxu0 %v287
  %v289 = vand.u32 %v78, 4294901760
  %v290 = vsub.f32 %v78, %v289
  %291 = vmatpush.msra.mxu0 %v290
  %v292 = vand.u32 %v77, 4294901760
  %v293 = vsub.f32 %v77, %v292
  %294 = vmatpush.msra.mxu0 %v293
  %v295 = vand.u32 %v76, 4294901760
  %v296 = vsub.f32 %v76, %v295
  %297 = vmatpush.msra.mxu0 %v296
  %v298 = vand.u32 %v75, 4294901760
  %v299 = vsub.f32 %v75, %v298
  %300 = vmatpush.msra.mxu0 %v299
  %v301 = vand.u32 %v74, 4294901760
  %v302 = vsub.f32 %v74, %v301
  %303 = vmatpush.msra.mxu0 %v302
  %v304 = vand.u32 %v73, 4294901760
  %v305 = vsub.f32 %v73, %v304
  %306 = vmatpush.msra.mxu0 %v305
  %v307 = vand.u32 %v72, 4294901760
  %v308 = vsub.f32 %v72, %v307
  %309 = vmatpush.msra.mxu0 %v308
  %v310 = vand.u32 %v71, 4294901760
  %v311 = vsub.f32 %v71, %v310
  %312 = vmatpush.msra.mxu0 %v311
  %v313 = vand.u32 %v34, 4294901760
  %v314 = vsub.f32 %v34, %v313
  %315 = vmatmul.f32.gmra.mxu0 %v314
  %v316 = vpop.f32.mrf.mxu0
  %v317 = vadd.f32 %v251, %v316
  %v318 = vand.u32 %v35, 4294901760
  %v319 = vsub.f32 %v35, %v318
  %320 = vmatmul.f32.gmra.mxu0 %v319
  %v321 = vpop.f32.mrf.mxu0
  %v322 = vadd.f32 %v255, %v321
  %v323 = vand.u32 %v36, 4294901760
  %v324 = vsub.f32 %v36, %v323
  %325 = vmatmul.f32.gmra.mxu0 %v324
  %v326 = vpop.f32.mrf.mxu0
  %v327 = vadd.f32 %v259, %v326
  %v328 = vand.u32 %v37, 4294901760
  %v329 = vsub.f32 %v37, %v328
  %330 = vmatmul.f32.gmra.mxu0 %v329
  %v331 = vpop.f32.mrf.mxu0
  %v332 = vadd.f32 %v263, %v331
  %333 = vdwg.mxu0
  %v334 = vand.u32 %v86, 4294901760
  %335 = vmatpush.msra.mxu0 %v334
  %v336 = vand.u32 %v85, 4294901760
  %337 = vmatpush.msra.mxu0 %v336
  %v338 = vand.u32 %v84, 4294901760
  %339 = vmatpush.msra.mxu0 %v338
  %v340 = vand.u32 %v83, 4294901760
  %341 = vmatpush.msra.mxu0 %v340
  %v342 = vand.u32 %v82, 4294901760
  %343 = vmatpush.msra.mxu0 %v342
  %v344 = vand.u32 %v81, 4294901760
  %345 = vmatpush.msra.mxu0 %v344
  %v346 = vand.u32 %v80, 4294901760
  %347 = vmatpush.msra.mxu0 %v346
  %v348 = vand.u32 %v79, 4294901760
  %349 = vmatpush.msra.mxu0 %v348
  %v350 = vand.u32 %v78, 4294901760
  %351 = vmatpush.msra.mxu0 %v350
  %v352 = vand.u32 %v77, 4294901760
  %353 = vmatpush.msra.mxu0 %v352
  %v354 = vand.u32 %v76, 4294901760
  %355 = vmatpush.msra.mxu0 %v354
  %v356 = vand.u32 %v75, 4294901760
  %357 = vmatpush.msra.mxu0 %v356
  %v358 = vand.u32 %v74, 4294901760
  %359 = vmatpush.msra.mxu0 %v358
  %v360 = vand.u32 %v73, 4294901760
  %361 = vmatpush.msra.mxu0 %v360
  %v362 = vand.u32 %v72, 4294901760
  %363 = vmatpush.msra.mxu0 %v362
  %v364 = vand.u32 %v71, 4294901760
  %365 = vmatpush.msra.mxu0 %v364
  %v366 = vand.u32 %v34, 4294901760
  %v367 = vsub.f32 %v34, %v366
  %v368 = vand.u32 %v367, 4294901760
  %369 = vmatmul.f32.gmra.mxu0 %v368
  %v370 = vpop.f32.mrf.mxu0
  %v371 = vadd.f32 %v317, %v370
  %v372 = vand.u32 %v35, 4294901760
  %v373 = vsub.f32 %v35, %v372
  %v374 = vand.u32 %v373, 4294901760
  %375 = vmatmul.f32.gmra.mxu0 %v374
  %v376 = vpop.f32.mrf.mxu0
  %v377 = vadd.f32 %v322, %v376
  %v378 = vand.u32 %v36, 4294901760
  %v379 = vsub.f32 %v36, %v378
  %v380 = vand.u32 %v379, 4294901760
  %381 = vmatmul.f32.gmra.mxu0 %v380
  %v382 = vpop.f32.mrf.mxu0
  %v383 = vadd.f32 %v327, %v382
  %v384 = vand.u32 %v37, 4294901760
  %v385 = vsub.f32 %v37, %v384
  %v386 = vand.u32 %v385, 4294901760
  %387 = vmatmul.f32.gmra.mxu0 %v386
  %v388 = vpop.f32.mrf.mxu0
  %v389 = vadd.f32 %v332, %v388
  %390 = vdwg.mxu0
  %v391 = vand.u32 %v86, 4294901760
  %v392 = vsub.f32 %v86, %v391
  %v393 = vand.u32 %v392, 4294901760
  %394 = vmatpush.msra.mxu0 %v393
  %v395 = vand.u32 %v85, 4294901760
  %v396 = vsub.f32 %v85, %v395
  %v397 = vand.u32 %v396, 4294901760
  %398 = vmatpush.msra.mxu0 %v397
  %v399 = vand.u32 %v84, 4294901760
  %v400 = vsub.f32 %v84, %v399
  %v401 = vand.u32 %v400, 4294901760
  %402 = vmatpush.msra.mxu0 %v401
  %v403 = vand.u32 %v83, 4294901760
  %v404 = vsub.f32 %v83, %v403
  %v405 = vand.u32 %v404, 4294901760
  %406 = vmatpush.msra.mxu0 %v405
  %v407 = vand.u32 %v82, 4294901760
  %v408 = vsub.f32 %v82, %v407
  %v409 = vand.u32 %v408, 4294901760
  %410 = vmatpush.msra.mxu0 %v409
  %v411 = vand.u32 %v81, 4294901760
  %v412 = vsub.f32 %v81, %v411
  %v413 = vand.u32 %v412, 4294901760
  %414 = vmatpush.msra.mxu0 %v413
  %v415 = vand.u32 %v80, 4294901760
  %v416 = vsub.f32 %v80, %v415
  %v417 = vand.u32 %v416, 4294901760
  %418 = vmatpush.msra.mxu0 %v417
  %v419 = vand.u32 %v79, 4294901760
  %v420 = vsub.f32 %v79, %v419
  %v421 = vand.u32 %v420, 4294901760
  %422 = vmatpush.msra.mxu0 %v421
  %v423 = vand.u32 %v78, 4294901760
  %v424 = vsub.f32 %v78, %v423
  %v425 = vand.u32 %v424, 4294901760
  %426 = vmatpush.msra.mxu0 %v425
  %v427 = vand.u32 %v77, 4294901760
  %v428 = vsub.f32 %v77, %v427
  %v429 = vand.u32 %v428, 4294901760
  %430 = vmatpush.msra.mxu0 %v429
  %v431 = vand.u32 %v76, 4294901760
  %v432 = vsub.f32 %v76, %v431
  %v433 = vand.u32 %v432, 4294901760
  %434 = vmatpush.msra.mxu0 %v433
  %v435 = vand.u32 %v75, 4294901760
  %v436 = vsub.f32 %v75, %v435
  %v437 = vand.u32 %v436, 4294901760
  %438 = vmatpush.msra.mxu0 %v437
  %v439 = vand.u32 %v74, 4294901760
  %v440 = vsub.f32 %v74, %v439
  %v441 = vand.u32 %v440, 4294901760
  %442 = vmatpush.msra.mxu0 %v441
  %v443 = vand.u32 %v73, 4294901760
  %v444 = vsub.f32 %v73, %v443
  %v445 = vand.u32 %v444, 4294901760
  %446 = vmatpush.msra.mxu0 %v445
  %v447 = vand.u32 %v72, 4294901760
  %v448 = vsub.f32 %v72, %v447
  %v449 = vand.u32 %v448, 4294901760
  %450 = vmatpush.msra.mxu0 %v449
  %v451 = vand.u32 %v71, 4294901760
  %v452 = vsub.f32 %v71, %v451
  %v453 = vand.u32 %v452, 4294901760
  %454 = vmatpush.msra.mxu0 %v453
  %v455 = vand.u32 %v34, 4294901760
  %456 = vmatmul.f32.gmra.mxu0 %v455
  %v457 = vpop.f32.mrf.mxu0
  %v458 = vadd.f32 %v371, %v457
  %v459 = vand.u32 %v35, 4294901760
  %460 = vmatmul.f32.gmra.mxu0 %v459
  %v461 = vpop.f32.mrf.mxu0
  %v462 = vadd.f32 %v377, %v461
  %v463 = vand.u32 %v36, 4294901760
  %464 = vmatmul.f32.gmra.mxu0 %v463
  %v465 = vpop.f32.mrf.mxu0
  %v466 = vadd.f32 %v383, %v465
  %v467 = vand.u32 %v37, 4294901760
  %468 = vmatmul.f32.gmra.mxu0 %v467
  %v469 = vpop.f32.mrf.mxu0
  %v470 = vadd.f32 %v389, %v469
  %471 = vdwg.mxu0
  %v472 = vand.u32 %v86, 4294901760
  %473 = vmatpush.msra.mxu0 %v472
  %v474 = vand.u32 %v85, 4294901760
  %475 = vmatpush.msra.mxu0 %v474
  %v476 = vand.u32 %v84, 4294901760
  %477 = vmatpush.msra.mxu0 %v476
  %v478 = vand.u32 %v83, 4294901760
  %479 = vmatpush.msra.mxu0 %v478
  %v480 = vand.u32 %v82, 4294901760
  %481 = vmatpush.msra.mxu0 %v480
  %v482 = vand.u32 %v81, 4294901760
  %483 = vmatpush.msra.mxu0 %v482
  %v484 = vand.u32 %v80, 4294901760
  %485 = vmatpush.msra.mxu0 %v484
  %v486 = vand.u32 %v79, 4294901760
  %487 = vmatpush.msra.mxu0 %v486
  %v488 = vand.u32 %v78, 4294901760
  %489 = vmatpush.msra.mxu0 %v488
  %v490 = vand.u32 %v77, 4294901760
  %491 = vmatpush.msra.mxu0 %v490
  %v492 = vand.u32 %v76, 4294901760
  %493 = vmatpush.msra.mxu0 %v492
  %v494 = vand.u32 %v75, 4294901760
  %495 = vmatpush.msra.mxu0 %v494
  %v496 = vand.u32 %v74, 4294901760
  %497 = vmatpush.msra.mxu0 %v496
  %v498 = vand.u32 %v73, 4294901760
  %499 = vmatpush.msra.mxu0 %v498
  %v500 = vand.u32 %v72, 4294901760
  %501 = vmatpush.msra.mxu0 %v500
  %v502 = vand.u32 %v71, 4294901760
  %503 = vmatpush.msra.mxu0 %v502
  %v504 = vand.u32 %v34, 4294901760
  %505 = vmatmul.f32.gmra.mxu0 %v504
  %v506 = vpop.f32.mrf.mxu0
  %v507 = vadd.f32 %v458, %v506
  %v508 = vand.u32 %v35, 4294901760
  %509 = vmatmul.f32.gmra.mxu0 %v508
  %v510 = vpop.f32.mrf.mxu0
  %v511 = vadd.f32 %v462, %v510
  %v512 = vand.u32 %v36, 4294901760
  %513 = vmatmul.f32.gmra.mxu0 %v512
  %v514 = vpop.f32.mrf.mxu0
  %v515 = vadd.f32 %v466, %v514
  %v516 = vand.u32 %v37, 4294901760
  %517 = vmatmul.f32.gmra.mxu0 %v516
  %v518 = vpop.f32.mrf.mxu0
  %v519 = vadd.f32 %v470, %v518
  %520 = vdwg.mxu0
  %v521 = vld [vmem:[%s2] sm:$0xff]
  %v522 = vld [vmem:[%s2 + $0x8] sm:$0xff]
  %v523 = vld [vmem:[%s2 + $0x10] sm:$0xff]
  %v524 = vld [vmem:[%s2 + $0x18] sm:$0xff]
  %v525 = vperm.slane %v15, 0
  %vm526 = vcmp.eq.s32.totalorder %v18, %v525
  %vm527 = vcmp.eq.s32.totalorder %v19, %v525
  %vm528 = vcmp.eq.s32.totalorder %v20, %v525
  %vm529 = vcmp.eq.s32.totalorder %v21, %v525
  %vm530 = vcmp.eq.s32.totalorder %v22, %v525
  %vm531 = vcmp.eq.s32.totalorder %v23, %v525
  %vm532 = vcmp.eq.s32.totalorder %v24, %v525
  %vm533 = vcmp.eq.s32.totalorder %v25, %v525
  %vm534 = vcmp.eq.s32.totalorder %v26, %v525
  %vm535 = vcmp.eq.s32.totalorder %v27, %v525
  %vm536 = vcmp.eq.s32.totalorder %v28, %v525
  %vm537 = vcmp.eq.s32.totalorder %v29, %v525
  %vm538 = vcmp.eq.s32.totalorder %v30, %v525
  %vm539 = vcmp.eq.s32.totalorder %v31, %v525
  %vm540 = vcmp.eq.s32.totalorder %v32, %v525
  %vm541 = vcmp.eq.s32.totalorder %v33, %v525
  %v542 = vsel %vm526, 1, 0
  %v543 = vsel %vm527, 1, 0
  %v544 = vsel %vm528, 1, 0
  %v545 = vsel %vm529, 1, 0
  %v546 = vsel %vm530, 1, 0
  %v547 = vsel %vm531, 1, 0
  %v548 = vsel %vm532, 1, 0
  %v549 = vsel %vm533, 1, 0
  %v550 = vsel %vm534, 1, 0
  %v551 = vsel %vm535, 1, 0
  %v552 = vsel %vm536, 1, 0
  %v553 = vsel %vm537, 1, 0
  %v554 = vsel %vm538, 1, 0
  %v555 = vsel %vm539, 1, 0
  %v556 = vsel %vm540, 1, 0
  %v557 = vsel %vm541, 1, 0
  %v558 = vcvt.s32.f32 %v542
  %v559 = vcvt.s32.f32 %v543
  %v560 = vcvt.s32.f32 %v544
  %v561 = vcvt.s32.f32 %v545
  %v562 = vcvt.s32.f32 %v546
  %v563 = vcvt.s32.f32 %v547
  %v564 = vcvt.s32.f32 %v548
  %v565 = vcvt.s32.f32 %v549
  %v566 = vcvt.s32.f32 %v550
  %v567 = vcvt.s32.f32 %v551
  %v568 = vcvt.s32.f32 %v552
  %v569 = vcvt.s32.f32 %v553
  %v570 = vcvt.s32.f32 %v554
  %v571 = vcvt.s32.f32 %v555
  %v572 = vcvt.s32.f32 %v556
  %v573 = vcvt.s32.f32 %v557
  %v574 = vperm.slane %v16, 0
  %vm575 = vcmp.eq.s32.totalorder %v18, %v574
  %vm576 = vcmp.eq.s32.totalorder %v19, %v574
  %vm577 = vcmp.eq.s32.totalorder %v20, %v574
  %vm578 = vcmp.eq.s32.totalorder %v21, %v574
  %vm579 = vcmp.eq.s32.totalorder %v22, %v574
  %vm580 = vcmp.eq.s32.totalorder %v23, %v574
  %vm581 = vcmp.eq.s32.totalorder %v24, %v574
  %vm582 = vcmp.eq.s32.totalorder %v25, %v574
  %vm583 = vcmp.eq.s32.totalorder %v26, %v574
  %vm584 = vcmp.eq.s32.totalorder %v27, %v574
  %vm585 = vcmp.eq.s32.totalorder %v28, %v574
  %vm586 = vcmp.eq.s32.totalorder %v29, %v574
  %vm587 = vcmp.eq.s32.totalorder %v30, %v574
  %vm588 = vcmp.eq.s32.totalorder %v31, %v574
  %vm589 = vcmp.eq.s32.totalorder %v32, %v574
  %vm590 = vcmp.eq.s32.totalorder %v33, %v574
  %v591 = vsel %vm575, 1, 0
  %v592 = vsel %vm576, 1, 0
  %v593 = vsel %vm577, 1, 0
  %v594 = vsel %vm578, 1, 0
  %v595 = vsel %vm579, 1, 0
  %v596 = vsel %vm580, 1, 0
  %v597 = vsel %vm581, 1, 0
  %v598 = vsel %vm582, 1, 0
  %v599 = vsel %vm583, 1, 0
  %v600 = vsel %vm584, 1, 0
  %v601 = vsel %vm585, 1, 0
  %v602 = vsel %vm586, 1, 0
  %v603 = vsel %vm587, 1, 0
  %v604 = vsel %vm588, 1, 0
  %v605 = vsel %vm589, 1, 0
  %v606 = vsel %vm590, 1, 0
  %v607 = vcvt.s32.f32 %v591
  %v608 = vcvt.s32.f32 %v592
  %v609 = vcvt.s32.f32 %v593
  %v610 = vcvt.s32.f32 %v594
  %v611 = vcvt.s32.f32 %v595
  %v612 = vcvt.s32.f32 %v596
  %v613 = vcvt.s32.f32 %v597
  %v614 = vcvt.s32.f32 %v598
  %v615 = vcvt.s32.f32 %v599
  %v616 = vcvt.s32.f32 %v600
  %v617 = vcvt.s32.f32 %v601
  %v618 = vcvt.s32.f32 %v602
  %v619 = vcvt.s32.f32 %v603
  %v620 = vcvt.s32.f32 %v604
  %v621 = vcvt.s32.f32 %v605
  %v622 = vcvt.s32.f32 %v606
  %v623 = vsub.f32 %v558, %v607
  %v624 = vsub.f32 %v559, %v608
  %v625 = vsub.f32 %v560, %v609
  %v626 = vsub.f32 %v561, %v610
  %v627 = vsub.f32 %v562, %v611
  %v628 = vsub.f32 %v563, %v612
  %v629 = vsub.f32 %v564, %v613
  %v630 = vsub.f32 %v565, %v614
  %v631 = vsub.f32 %v566, %v615
  %v632 = vsub.f32 %v567, %v616
  %v633 = vsub.f32 %v568, %v617
  %v634 = vsub.f32 %v569, %v618
  %v635 = vsub.f32 %v570, %v619
  %v636 = vsub.f32 %v571, %v620
  %v637 = vsub.f32 %v572, %v621
  %v638 = vsub.f32 %v573, %v622
  %v639 = vand.u32 %v638, 4294901760
  %640 = vmatpush.msra.mxu0 %v639
  %v641 = vand.u32 %v637, 4294901760
  %642 = vmatpush.msra.mxu0 %v641
  %v643 = vand.u32 %v636, 4294901760
  %644 = vmatpush.msra.mxu0 %v643
  %v645 = vand.u32 %v635, 4294901760
  %646 = vmatpush.msra.mxu0 %v645
  %v647 = vand.u32 %v634, 4294901760
  %648 = vmatpush.msra.mxu0 %v647
  %v649 = vand.u32 %v633, 4294901760
  %650 = vmatpush.msra.mxu0 %v649
  %v651 = vand.u32 %v632, 4294901760
  %652 = vmatpush.msra.mxu0 %v651
  %v653 = vand.u32 %v631, 4294901760
  %654 = vmatpush.msra.mxu0 %v653
  %v655 = vand.u32 %v630, 4294901760
  %656 = vmatpush.msra.mxu0 %v655
  %v657 = vand.u32 %v629, 4294901760
  %658 = vmatpush.msra.mxu0 %v657
  %v659 = vand.u32 %v628, 4294901760
  %660 = vmatpush.msra.mxu0 %v659
  %v661 = vand.u32 %v627, 4294901760
  %662 = vmatpush.msra.mxu0 %v661
  %v663 = vand.u32 %v626, 4294901760
  %664 = vmatpush.msra.mxu0 %v663
  %v665 = vand.u32 %v625, 4294901760
  %666 = vmatpush.msra.mxu0 %v665
  %v667 = vand.u32 %v624, 4294901760
  %668 = vmatpush.msra.mxu0 %v667
  %v669 = vand.u32 %v623, 4294901760
  %670 = vmatpush.msra.mxu0 %v669
  %v671 = vand.u32 %v521, 4294901760
  %v672 = vsub.f32 %v521, %v671
  %v673 = vand.u32 %v672, 4294901760
  %v674 = vsub.f32 %v672, %v673
  %v675 = vand.u32 %v674, 4294901760
  %676 = vmatmul.f32.gmra.mxu0 %v675
  %v677 = vpop.f32.mrf.mxu0
  %v678 = vadd.f32 0.0, %v677
  %v679 = vand.u32 %v522, 4294901760
  %v680 = vsub.f32 %v522, %v679
  %v681 = vand.u32 %v680, 4294901760
  %v682 = vsub.f32 %v680, %v681
  %v683 = vand.u32 %v682, 4294901760
  %684 = vmatmul.f32.gmra.mxu0 %v683
  %v685 = vpop.f32.mrf.mxu0
  %v686 = vadd.f32 0.0, %v685
  %v687 = vand.u32 %v523, 4294901760
  %v688 = vsub.f32 %v523, %v687
  %v689 = vand.u32 %v688, 4294901760
  %v690 = vsub.f32 %v688, %v689
  %v691 = vand.u32 %v690, 4294901760
  %692 = vmatmul.f32.gmra.mxu0 %v691
  %v693 = vpop.f32.mrf.mxu0
  %v694 = vadd.f32 0.0, %v693
  %v695 = vand.u32 %v524, 4294901760
  %v696 = vsub.f32 %v524, %v695
  %v697 = vand.u32 %v696, 4294901760
  %v698 = vsub.f32 %v696, %v697
  %v699 = vand.u32 %v698, 4294901760
  %700 = vmatmul.f32.gmra.mxu0 %v699
  %v701 = vpop.f32.mrf.mxu0
  %v702 = vadd.f32 0.0, %v701
  %703 = vdwg.mxu0
  %v704 = vand.u32 %v638, 4294901760
  %v705 = vsub.f32 %v638, %v704
  %v706 = vand.u32 %v705, 4294901760
  %v707 = vsub.f32 %v705, %v706
  %v708 = vand.u32 %v707, 4294901760
  %709 = vmatpush.msra.mxu0 %v708
  %v710 = vand.u32 %v637, 4294901760
  %v711 = vsub.f32 %v637, %v710
  %v712 = vand.u32 %v711, 4294901760
  %v713 = vsub.f32 %v711, %v712
  %v714 = vand.u32 %v713, 4294901760
  %715 = vmatpush.msra.mxu0 %v714
  %v716 = vand.u32 %v636, 4294901760
  %v717 = vsub.f32 %v636, %v716
  %v718 = vand.u32 %v717, 4294901760
  %v719 = vsub.f32 %v717, %v718
  %v720 = vand.u32 %v719, 4294901760
  %721 = vmatpush.msra.mxu0 %v720
  %v722 = vand.u32 %v635, 4294901760
  %v723 = vsub.f32 %v635, %v722
  %v724 = vand.u32 %v723, 4294901760
  %v725 = vsub.f32 %v723, %v724
  %v726 = vand.u32 %v725, 4294901760
  %727 = vmatpush.msra.mxu0 %v726
  %v728 = vand.u32 %v634, 4294901760
  %v729 = vsub.f32 %v634, %v728
  %v730 = vand.u32 %v729, 4294901760
  %v731 = vsub.f32 %v729, %v730
  %v732 = vand.u32 %v731, 4294901760
  %733 = vmatpush.msra.mxu0 %v732
  %v734 = vand.u32 %v633, 4294901760
  %v735 = vsub.f32 %v633, %v734
  %v736 = vand.u32 %v735, 4294901760
  %v737 = vsub.f32 %v735, %v736
  %v738 = vand.u32 %v737, 4294901760
  %739 = vmatpush.msra.mxu0 %v738
  %v740 = vand.u32 %v632, 4294901760
  %v741 = vsub.f32 %v632, %v740
  %v742 = vand.u32 %v741, 4294901760
  %v743 = vsub.f32 %v741, %v742
  %v744 = vand.u32 %v743, 4294901760
  %745 = vmatpush.msra.mxu0 %v744
  %v746 = vand.u32 %v631, 4294901760
  %v747 = vsub.f32 %v631, %v746
  %v748 = vand.u32 %v747, 4294901760
  %v749 = vsub.f32 %v747, %v748
  %v750 = vand.u32 %v749, 4294901760
  %751 = vmatpush.msra.mxu0 %v750
  %v752 = vand.u32 %v630, 4294901760
  %v753 = vsub.f32 %v630, %v752
  %v754 = vand.u32 %v753, 4294901760
  %v755 = vsub.f32 %v753, %v754
  %v756 = vand.u32 %v755, 4294901760
  %757 = vmatpush.msra.mxu0 %v756
  %v758 = vand.u32 %v629, 4294901760
  %v759 = vsub.f32 %v629, %v758
  %v760 = vand.u32 %v759, 4294901760
  %v761 = vsub.f32 %v759, %v760
  %v762 = vand.u32 %v761, 4294901760
  %763 = vmatpush.msra.mxu0 %v762
  %v764 = vand.u32 %v628, 4294901760
  %v765 = vsub.f32 %v628, %v764
  %v766 = vand.u32 %v765, 4294901760
  %v767 = vsub.f32 %v765, %v766
  %v768 = vand.u32 %v767, 4294901760
  %769 = vmatpush.msra.mxu0 %v768
  %v770 = vand.u32 %v627, 4294901760
  %v771 = vsub.f32 %v627, %v770
  %v772 = vand.u32 %v771, 4294901760
  %v773 = vsub.f32 %v771, %v772
  %v774 = vand.u32 %v773, 4294901760
  %775 = vmatpush.msra.mxu0 %v774
  %v776 = vand.u32 %v626, 4294901760
  %v777 = vsub.f32 %v626, %v776
  %v778 = vand.u32 %v777, 4294901760
  %v779 = vsub.f32 %v777, %v778
  %v780 = vand.u32 %v779, 4294901760
  %781 = vmatpush.msra.mxu0 %v780
  %v782 = vand.u32 %v625, 4294901760
  %v783 = vsub.f32 %v625, %v782
  %v784 = vand.u32 %v783, 4294901760
  %v785 = vsub.f32 %v783, %v784
  %v786 = vand.u32 %v785, 4294901760
  %787 = vmatpush.msra.mxu0 %v786
  %v788 = vand.u32 %v624, 4294901760
  %v789 = vsub.f32 %v624, %v788
  %v790 = vand.u32 %v789, 4294901760
  %v791 = vsub.f32 %v789, %v790
  %v792 = vand.u32 %v791, 4294901760
  %793 = vmatpush.msra.mxu0 %v792
  %v794 = vand.u32 %v623, 4294901760
  %v795 = vsub.f32 %v623, %v794
  %v796 = vand.u32 %v795, 4294901760
  %v797 = vsub.f32 %v795, %v796
  %v798 = vand.u32 %v797, 4294901760
  %799 = vmatpush.msra.mxu0 %v798
  %v800 = vand.u32 %v521, 4294901760
  %801 = vmatmul.f32.gmra.mxu0 %v800
  %v802 = vpop.f32.mrf.mxu0
  %v803 = vadd.f32 %v678, %v802
  %v804 = vand.u32 %v522, 4294901760
  %805 = vmatmul.f32.gmra.mxu0 %v804
  %v806 = vpop.f32.mrf.mxu0
  %v807 = vadd.f32 %v686, %v806
  %v808 = vand.u32 %v523, 4294901760
  %809 = vmatmul.f32.gmra.mxu0 %v808
  %v810 = vpop.f32.mrf.mxu0
  %v811 = vadd.f32 %v694, %v810
  %v812 = vand.u32 %v524, 4294901760
  %813 = vmatmul.f32.gmra.mxu0 %v812
  %v814 = vpop.f32.mrf.mxu0
  %v815 = vadd.f32 %v702, %v814
  %816 = vdwg.mxu0
  %v817 = vand.u32 %v638, 4294901760
  %v818 = vsub.f32 %v638, %v817
  %819 = vmatpush.msra.mxu0 %v818
  %v820 = vand.u32 %v637, 4294901760
  %v821 = vsub.f32 %v637, %v820
  %822 = vmatpush.msra.mxu0 %v821
  %v823 = vand.u32 %v636, 4294901760
  %v824 = vsub.f32 %v636, %v823
  %825 = vmatpush.msra.mxu0 %v824
  %v826 = vand.u32 %v635, 4294901760
  %v827 = vsub.f32 %v635, %v826
  %828 = vmatpush.msra.mxu0 %v827
  %v829 = vand.u32 %v634, 4294901760
  %v830 = vsub.f32 %v634, %v829
  %831 = vmatpush.msra.mxu0 %v830
  %v832 = vand.u32 %v633, 4294901760
  %v833 = vsub.f32 %v633, %v832
  %834 = vmatpush.msra.mxu0 %v833
  %v835 = vand.u32 %v632, 4294901760
  %v836 = vsub.f32 %v632, %v835
  %837 = vmatpush.msra.mxu0 %v836
  %v838 = vand.u32 %v631, 4294901760
  %v839 = vsub.f32 %v631, %v838
  %840 = vmatpush.msra.mxu0 %v839
  %v841 = vand.u32 %v630, 4294901760
  %v842 = vsub.f32 %v630, %v841
  %843 = vmatpush.msra.mxu0 %v842
  %v844 = vand.u32 %v629, 4294901760
  %v845 = vsub.f32 %v629, %v844
  %846 = vmatpush.msra.mxu0 %v845
  %v847 = vand.u32 %v628, 4294901760
  %v848 = vsub.f32 %v628, %v847
  %849 = vmatpush.msra.mxu0 %v848
  %v850 = vand.u32 %v627, 4294901760
  %v851 = vsub.f32 %v627, %v850
  %852 = vmatpush.msra.mxu0 %v851
  %v853 = vand.u32 %v626, 4294901760
  %v854 = vsub.f32 %v626, %v853
  %855 = vmatpush.msra.mxu0 %v854
  %v856 = vand.u32 %v625, 4294901760
  %v857 = vsub.f32 %v625, %v856
  %858 = vmatpush.msra.mxu0 %v857
  %v859 = vand.u32 %v624, 4294901760
  %v860 = vsub.f32 %v624, %v859
  %861 = vmatpush.msra.mxu0 %v860
  %v862 = vand.u32 %v623, 4294901760
  %v863 = vsub.f32 %v623, %v862
  %864 = vmatpush.msra.mxu0 %v863
  %v865 = vand.u32 %v521, 4294901760
  %v866 = vsub.f32 %v521, %v865
  %867 = vmatmul.f32.gmra.mxu0 %v866
  %v868 = vpop.f32.mrf.mxu0
  %v869 = vadd.f32 %v803, %v868
  %v870 = vand.u32 %v522, 4294901760
  %v871 = vsub.f32 %v522, %v870
  %872 = vmatmul.f32.gmra.mxu0 %v871
  %v873 = vpop.f32.mrf.mxu0
  %v874 = vadd.f32 %v807, %v873
  %v875 = vand.u32 %v523, 4294901760
  %v876 = vsub.f32 %v523, %v875
  %877 = vmatmul.f32.gmra.mxu0 %v876
  %v878 = vpop.f32.mrf.mxu0
  %v879 = vadd.f32 %v811, %v878
  %v880 = vand.u32 %v524, 4294901760
  %v881 = vsub.f32 %v524, %v880
  %882 = vmatmul.f32.gmra.mxu0 %v881
  %v883 = vpop.f32.mrf.mxu0
  %v884 = vadd.f32 %v815, %v883
  %885 = vdwg.mxu0
  %v886 = vand.u32 %v638, 4294901760
  %887 = vmatpush.msra.mxu0 %v886
  %v888 = vand.u32 %v637, 4294901760
  %889 = vmatpush.msra.mxu0 %v888
  %v890 = vand.u32 %v636, 4294901760
  %891 = vmatpush.msra.mxu0 %v890
  %v892 = vand.u32 %v635, 4294901760
  %893 = vmatpush.msra.mxu0 %v892
  %v894 = vand.u32 %v634, 4294901760
  %895 = vmatpush.msra.mxu0 %v894
  %v896 = vand.u32 %v633, 4294901760
  %897 = vmatpush.msra.mxu0 %v896
  %v898 = vand.u32 %v632, 4294901760
  %899 = vmatpush.msra.mxu0 %v898
  %v900 = vand.u32 %v631, 4294901760
  %901 = vmatpush.msra.mxu0 %v900
  %v902 = vand.u32 %v630, 4294901760
  %903 = vmatpush.msra.mxu0 %v902
  %v904 = vand.u32 %v629, 4294901760
  %905 = vmatpush.msra.mxu0 %v904
  %v906 = vand.u32 %v628, 4294901760
  %907 = vmatpush.msra.mxu0 %v906
  %v908 = vand.u32 %v627, 4294901760
  %909 = vmatpush.msra.mxu0 %v908
  %v910 = vand.u32 %v626, 4294901760
  %911 = vmatpush.msra.mxu0 %v910
  %v912 = vand.u32 %v625, 4294901760
  %913 = vmatpush.msra.mxu0 %v912
  %v914 = vand.u32 %v624, 4294901760
  %915 = vmatpush.msra.mxu0 %v914
  %v916 = vand.u32 %v623, 4294901760
  %917 = vmatpush.msra.mxu0 %v916
  %v918 = vand.u32 %v521, 4294901760
  %v919 = vsub.f32 %v521, %v918
  %v920 = vand.u32 %v919, 4294901760
  %921 = vmatmul.f32.gmra.mxu0 %v920
  %v922 = vpop.f32.mrf.mxu0
  %v923 = vadd.f32 %v869, %v922
  %v924 = vand.u32 %v522, 4294901760
  %v925 = vsub.f32 %v522, %v924
  %v926 = vand.u32 %v925, 4294901760
  %927 = vmatmul.f32.gmra.mxu0 %v926
  %v928 = vpop.f32.mrf.mxu0
  %v929 = vadd.f32 %v874, %v928
  %v930 = vand.u32 %v523, 4294901760
  %v931 = vsub.f32 %v523, %v930
  %v932 = vand.u32 %v931, 4294901760
  %933 = vmatmul.f32.gmra.mxu0 %v932
  %v934 = vpop.f32.mrf.mxu0
  %v935 = vadd.f32 %v879, %v934
  %v936 = vand.u32 %v524, 4294901760
  %v937 = vsub.f32 %v524, %v936
  %v938 = vand.u32 %v937, 4294901760
  %939 = vmatmul.f32.gmra.mxu0 %v938
  %v940 = vpop.f32.mrf.mxu0
  %v941 = vadd.f32 %v884, %v940
  %942 = vdwg.mxu0
  %v943 = vand.u32 %v638, 4294901760
  %v944 = vsub.f32 %v638, %v943
  %v945 = vand.u32 %v944, 4294901760
  %946 = vmatpush.msra.mxu0 %v945
  %v947 = vand.u32 %v637, 4294901760
  %v948 = vsub.f32 %v637, %v947
  %v949 = vand.u32 %v948, 4294901760
  %950 = vmatpush.msra.mxu0 %v949
  %v951 = vand.u32 %v636, 4294901760
  %v952 = vsub.f32 %v636, %v951
  %v953 = vand.u32 %v952, 4294901760
  %954 = vmatpush.msra.mxu0 %v953
  %v955 = vand.u32 %v635, 4294901760
  %v956 = vsub.f32 %v635, %v955
  %v957 = vand.u32 %v956, 4294901760
  %958 = vmatpush.msra.mxu0 %v957
  %v959 = vand.u32 %v634, 4294901760
  %v960 = vsub.f32 %v634, %v959
  %v961 = vand.u32 %v960, 4294901760
  %962 = vmatpush.msra.mxu0 %v961
  %v963 = vand.u32 %v633, 4294901760
  %v964 = vsub.f32 %v633, %v963
  %v965 = vand.u32 %v964, 4294901760
  %966 = vmatpush.msra.mxu0 %v965
  %v967 = vand.u32 %v632, 4294901760
  %v968 = vsub.f32 %v632, %v967
  %v969 = vand.u32 %v968, 4294901760
  %970 = vmatpush.msra.mxu0 %v969
  %v971 = vand.u32 %v631, 4294901760
  %v972 = vsub.f32 %v631, %v971
  %v973 = vand.u32 %v972, 4294901760
  %974 = vmatpush.msra.mxu0 %v973
  %v975 = vand.u32 %v630, 4294901760
  %v976 = vsub.f32 %v630, %v975
  %v977 = vand.u32 %v976, 4294901760
  %978 = vmatpush.msra.mxu0 %v977
  %v979 = vand.u32 %v629, 4294901760
  %v980 = vsub.f32 %v629, %v979
  %v981 = vand.u32 %v980, 4294901760
  %982 = vmatpush.msra.mxu0 %v981
  %v983 = vand.u32 %v628, 4294901760
  %v984 = vsub.f32 %v628, %v983
  %v985 = vand.u32 %v984, 4294901760
  %986 = vmatpush.msra.mxu0 %v985
  %v987 = vand.u32 %v627, 4294901760
  %v988 = vsub.f32 %v627, %v987
  %v989 = vand.u32 %v988, 4294901760
  %990 = vmatpush.msra.mxu0 %v989
  %v991 = vand.u32 %v626, 4294901760
  %v992 = vsub.f32 %v626, %v991
  %v993 = vand.u32 %v992, 4294901760
  %994 = vmatpush.msra.mxu0 %v993
  %v995 = vand.u32 %v625, 4294901760
  %v996 = vsub.f32 %v625, %v995
  %v997 = vand.u32 %v996, 4294901760
  %998 = vmatpush.msra.mxu0 %v997
  %v999 = vand.u32 %v624, 4294901760
  %v1000 = vsub.f32 %v624, %v999
  %v1001 = vand.u32 %v1000, 4294901760
  %1002 = vmatpush.msra.mxu0 %v1001
  %v1003 = vand.u32 %v623, 4294901760
  %v1004 = vsub.f32 %v623, %v1003
  %v1005 = vand.u32 %v1004, 4294901760
  %1006 = vmatpush.msra.mxu0 %v1005
  %v1007 = vand.u32 %v521, 4294901760
  %1008 = vmatmul.f32.gmra.mxu0 %v1007
  %v1009 = vpop.f32.mrf.mxu0
  %v1010 = vadd.f32 %v923, %v1009
  %v1011 = vand.u32 %v522, 4294901760
  %1012 = vmatmul.f32.gmra.mxu0 %v1011
  %v1013 = vpop.f32.mrf.mxu0
  %v1014 = vadd.f32 %v929, %v1013
  %v1015 = vand.u32 %v523, 4294901760
  %1016 = vmatmul.f32.gmra.mxu0 %v1015
  %v1017 = vpop.f32.mrf.mxu0
  %v1018 = vadd.f32 %v935, %v1017
  %v1019 = vand.u32 %v524, 4294901760
  %1020 = vmatmul.f32.gmra.mxu0 %v1019
  %v1021 = vpop.f32.mrf.mxu0
  %v1022 = vadd.f32 %v941, %v1021
  %1023 = vdwg.mxu0
  %v1024 = vand.u32 %v638, 4294901760
  %1025 = vmatpush.msra.mxu0 %v1024
  %v1026 = vand.u32 %v637, 4294901760
  %1027 = vmatpush.msra.mxu0 %v1026
  %v1028 = vand.u32 %v636, 4294901760
  %1029 = vmatpush.msra.mxu0 %v1028
  %v1030 = vand.u32 %v635, 4294901760
  %1031 = vmatpush.msra.mxu0 %v1030
  %v1032 = vand.u32 %v634, 4294901760
  %1033 = vmatpush.msra.mxu0 %v1032
  %v1034 = vand.u32 %v633, 4294901760
  %1035 = vmatpush.msra.mxu0 %v1034
  %v1036 = vand.u32 %v632, 4294901760
  %1037 = vmatpush.msra.mxu0 %v1036
  %v1038 = vand.u32 %v631, 4294901760
  %1039 = vmatpush.msra.mxu0 %v1038
  %v1040 = vand.u32 %v630, 4294901760
  %1041 = vmatpush.msra.mxu0 %v1040
  %v1042 = vand.u32 %v629, 4294901760
  %1043 = vmatpush.msra.mxu0 %v1042
  %v1044 = vand.u32 %v628, 4294901760
  %1045 = vmatpush.msra.mxu0 %v1044
  %v1046 = vand.u32 %v627, 4294901760
  %1047 = vmatpush.msra.mxu0 %v1046
  %v1048 = vand.u32 %v626, 4294901760
  %1049 = vmatpush.msra.mxu0 %v1048
  %v1050 = vand.u32 %v625, 4294901760
  %1051 = vmatpush.msra.mxu0 %v1050
  %v1052 = vand.u32 %v624, 4294901760
  %1053 = vmatpush.msra.mxu0 %v1052
  %v1054 = vand.u32 %v623, 4294901760
  %1055 = vmatpush.msra.mxu0 %v1054
  %v1056 = vand.u32 %v521, 4294901760
  %1057 = vmatmul.f32.gmra.mxu0 %v1056
  %v1058 = vpop.f32.mrf.mxu0
  %v1059 = vadd.f32 %v1010, %v1058
  %v1060 = vand.u32 %v522, 4294901760
  %1061 = vmatmul.f32.gmra.mxu0 %v1060
  %v1062 = vpop.f32.mrf.mxu0
  %v1063 = vadd.f32 %v1014, %v1062
  %v1064 = vand.u32 %v523, 4294901760
  %1065 = vmatmul.f32.gmra.mxu0 %v1064
  %v1066 = vpop.f32.mrf.mxu0
  %v1067 = vadd.f32 %v1018, %v1066
  %v1068 = vand.u32 %v524, 4294901760
  %1069 = vmatmul.f32.gmra.mxu0 %v1068
  %v1070 = vpop.f32.mrf.mxu0
  %v1071 = vadd.f32 %v1022, %v1070
  %1072 = vdwg.mxu0
  %v1073 = vmul.f32 %v507, %v1059
  %v1074 = vmul.f32 %v511, %v1063
  %v1075 = vmul.f32 %v515, %v1067
  %v1076 = vmul.f32 %v519, %v1071
  %v1077 = vadd.f32 %v1073, %v1074
  %v1078 = vadd.f32 %v1077, %v1075
  %v1079 = vadd.f32 %v1078, %v1076
  %v1080 = vrot.slane %v1079, 4
  %v1081 = vadd.f32 %v1079, %v1080
  %v1082 = vrot.slane %v1081, 2
  %v1083 = vadd.f32 %v1081, %v1082
  %v1084 = vrot.slane %v1083, 1
  %v1085 = vadd.f32 %v1083, %v1084
  %1086 = vst [vmem:[%s3] sm:$0x1] %v1085
  // Predicated region
  $region14: #{bpr_forward.1} parent=0 // pred_check
    _
  $region15: #{bpr_forward.1} parent=0 // pred_check_branch
    %1088 = sbr.rel (0) target = $region17
  $region16: #{bpr_forward.1} parent=0 // pred_region
    _
  $region17: #{bpr_forward.1} parent=0 // pred_fallthru
    _
  // Predicated region
  $region18: #{bpr_forward.1} parent=0 // pred_check
    _
  $region19: #{bpr_forward.1} parent=0 // pred_check_branch
    %1090 = sbr.rel (0) target = $region21
  $region20: #{bpr_forward.1} parent=0 // pred_region
    _
  $region21: #{bpr_forward.1} parent=0 // pred_fallthru
    _

</llo_original>
